<compile_context>
chip_gen: v7x
topology: tpu7x:2x2x1
jax: 0.10.0
libtpu: 0.0.40
codegen_flags: <defaults>
</compile_context>

<pallas_src>
import jax
import jax.numpy as jnp
from jax.experimental import pallas as pl
from jax.experimental.pallas import tpu as pltpu

# VMEM budget used when sizing the row tile (headroom-safe on v7x's 64 MiB/TC;
# v5e/v6e have 128 MiB).  The compiler-param limit is capped slightly higher.
_TILE_VMEM_BUDGET = 40 * 1024 * 1024
_VMEM_LIMIT_CAP = 48 * 1024 * 1024


# ----------------------------- Pallas kernel -------------------------------

def _linear_kernel(x_ref, w_ref, b_ref, o_ref):
    # x_ref: (TM, Kp)  w_ref: (Kp, Ep)  b_ref: (1, Ep)  o_ref: (TM, Ep)
    acc = jnp.dot(x_ref[...], w_ref[...], preferred_element_type=jnp.float32)
    o_ref[...] = (acc + b_ref[...].astype(jnp.float32)).astype(o_ref.dtype)


# ------------------------------ Helpers / packing ---------------------------

def _round_up(x, m):
    return ((x + m - 1) // m) * m


def _cdiv(a, b):
    return -(-a // b)


def _choose_pack(K, E, max_pack=16):
    """Smallest P such that P*K and P*E are lane-dense (multiples of 128)."""
    for cand in (1, 2, 4, 8, 16):
        if cand <= max_pack and (cand * K) % 128 == 0 and (cand * E) % 128 == 0:
            return cand
    return 1


def pack_patch_embed_params(weight, bias, *, max_pack=16, compute_dtype=None):
    """One-time weight prep (do this once, outside the per-step forward).

    weight: (E, K) torch nn.Linear layout, bias: (E,).
      * Transposes the weight to (K, E) for the MXU.
      * Block-diagonal packs P patches per MXU row when K/E are not multiples
        of 128 (lane density).  P == 1 for the production config (K=256, E=768).
        NOTE: P > 1 does P× redundant MXU FLOPs on the zero blocks — fine
        while the kernel stays HBM-bound (it is, by a wide margin).
      * Stores a compute_dtype (e.g. bf16) copy of the weight once, so no
        per-call cast is needed.  Bias stays f32 (added to the f32 accumulator).
    """
    E, K = weight.shape
    P = _choose_pack(K, E, max_pack)
    w_t = weight.T                                            # (K, E)
    if P > 1:
        w_bd = jnp.kron(jnp.eye(P, dtype=weight.dtype), w_t)  # (P*K, P*E)
        b_bd = jnp.tile(bias, P).reshape(1, P * E)
    else:
        w_bd = w_t
        b_bd = bias.reshape(1, E)
    if compute_dtype is not None:
        w_bd = w_bd.astype(compute_dtype)
    return {"w_bd": w_bd, "b_bd": b_bd.astype(jnp.float32),
            "P": P, "K": K, "E": E}


def _choose_tile_rows(Mp, tile_rows, *, in_row_bytes, out_row_bytes,
                      resident_bytes):
    """Pick TM (multiple of 8): as large as fits the VMEM budget, then nudge
    so the grid step count is even (megacore balance on v7x)."""
    TM = max(8, min(_round_up(tile_rows, 8), _round_up(Mp, 8)))

    def vmem(tm):  # double-buffered in/out tiles + (worst-case 2x) residents
        return 2 * tm * (in_row_bytes + out_row_bytes) + 2 * resident_bytes

    while TM > 8 and vmem(TM) > _TILE_VMEM_BUDGET:
        TM = max(8, _round_up(TM // 2, 8))

    steps = _cdiv(Mp, TM)
    if steps > 1 and steps % 2 == 1:
        cand = _round_up(_cdiv(Mp, steps + 1), 8)
        if cand >= 8 and _cdiv(Mp, cand) % 2 == 0 and \
                vmem(cand) <= _TILE_VMEM_BUDGET:
            TM = cand
    return TM


# --------------------------- Tiled linear wrapper ---------------------------

def _linear_pallas_packed(x2d, params, *, tile_rows=2048, out_dtype=None):
    """x2d: (M, K) -> (M, E) = x2d @ W.T + b using the pre-packed params."""
    M, K = x2d.shape
    P, E = params["P"], params["E"]
    assert K == params["K"], "input feature dim does not match packed weight"
    w_bd, b_bd = params["w_bd"], params["b_bd"]
    Kp, Ep = P * K, P * E
    out_dtype = jnp.dtype(out_dtype) if out_dtype is not None else x2d.dtype

    # Activations should already arrive in the weight's compute dtype (the
    # forward casts at the rearrange producer); this is then a no-op.
    if x2d.dtype != w_bd.dtype:
        x2d = x2d.astype(w_bd.dtype)

    # Pack P patches per MXU row.  A (tiny, <=P-1 rows) tail pad is only
    # needed when M % P != 0 — never for the production config where P == 1.
    # The ragged tail along the tile axis is left to Pallas' masked partial
    # blocks, so there is no TM padding pass and no output slice pass.
    tail = (-M) % P
    if tail:
        x2d = jnp.pad(x2d, ((0, tail), (0, 0)))
    Mp = x2d.shape[0] // P
    x_packed = x2d.reshape(Mp, Kp)

    itm_x = x_packed.dtype.itemsize
    itm_o = out_dtype.itemsize
    resident_bytes = (w_bd.size * w_bd.dtype.itemsize
                      + b_bd.size * b_bd.dtype.itemsize)
    TM = _choose_tile_rows(Mp, tile_rows,
                           in_row_bytes=Kp * itm_x, out_row_bytes=Ep * itm_o,
                           resident_bytes=resident_bytes)
    grid = (_cdiv(Mp, TM),)

    vmem_need = 2 * TM * (Kp * itm_x + Ep * itm_o) + 2 * resident_bytes
    vmem_limit = int(min(_VMEM_LIMIT_CAP, max(32 << 20, vmem_need + (4 << 20))))

    cost = pl.CostEstimate(
        flops=2 * M * K * E,          # useful FLOPs (kron zero blocks excluded)
        bytes_accessed=(x_packed.size * itm_x + resident_bytes
                        + Mp * Ep * itm_o),
        transcendentals=0)

    def _const_spec(shape, single_buffered):
        if single_buffered:
            # Constant index_map: the block never changes, one resident copy
            # suffices (skip the second pipeline buffer for the weight/bias).
            return pl.BlockSpec(shape, lambda i: (0, 0),
                                pipeline_mode=pl.Buffered(1))
        return pl.BlockSpec(shape, lambda i: (0, 0))

    def _run(single_buffered_consts):
        return pl.pallas_call(
            _linear_kernel,
            out_shape=jax.ShapeDtypeStruct((Mp, Ep), out_dtype),
            grid=grid,
            in_specs=[
                pl.BlockSpec((TM, Kp), lambda i: (i, 0)),        # streamed rows
                _const_spec((Kp, Ep), single_buffered_consts),   # resident W
                _const_spec((1, Ep), single_buffered_consts),    # resident b
            ],
            out_specs=pl.BlockSpec((TM, Ep), lambda i: (i, 0)),
            compiler_params=pltpu.CompilerParams(
                dimension_semantics=("parallel",),
                vmem_limit_bytes=vmem_limit),
            cost_estimate=cost,
        )(x_packed, w_bd, b_bd)

    try:
        out_packed = _run(True)
    except Exception:  # graceful fallback if Buffered(1) is unsupported
        out_packed = _run(False)

    # Unpack (Mp, P*E) -> (Mp*P, E); slice only when a P-tail pad was added.
    out = out_packed.reshape(Mp * P, E)
    if tail:
        out = out[:M]
    return out


# ------------------------------ Module forward -------------------------------

def patch_embed_v2_forward(melspec, packed_params, *, patch_height, patch_width,
                           length=None, out_dtype=None, tile_rows=2048):
    """Reproduces PatchEmbed_v2.forward.

    melspec       : (b, c, H, W) (NCHW, same as PyTorch)
    packed_params : output of pack_patch_embed_params(weight, bias)
    out_dtype     : dtype of patch_embed (default: melspec.dtype)
    Returns (patch, patch_embed, patch_length).  If the params were packed
    with compute_dtype=bf16, `patch` is returned in bf16 (caller opted in).
    """
    b, c, H, W = melspec.shape
    height = H - H % patch_height
    width = W - W % patch_width
    x = melspec[:, :, :height, :width]

    # Cast at the producer so it fuses into the transpose's HBM pass instead of
    # a standalone astype over the rearranged patches.
    compute_dtype = packed_params["w_bd"].dtype
    if x.dtype != compute_dtype:
        x = x.astype(compute_dtype)

    h = height // patch_height
    w = width // patch_width

    # einops: 'b c (h p1) (w p2) -> b (w h) (p1 p2 c)'
    #   seq index     = w_idx * h + h_idx
    #   feature index = p1 * (p2*c) + p2 * c + c
    # TODO(synk): if `patch` were not part of the module's return contract this
    # rearrange could be fused into the kernel's index_map, skipping one full
    # HBM pass over the input.
    x = x.reshape(b, c, h, patch_height, w, patch_width)
    x = jnp.transpose(x, (0, 4, 2, 3, 5, 1))          # (b, w, h, p1, p2, c)
    K = patch_height * patch_width * c
    patch = x.reshape(b, w * h, K)

    E = packed_params["E"]
    M = b * w * h
    out2d = _linear_pallas_packed(
        patch.reshape(M, K), packed_params, tile_rows=tile_rows,
        out_dtype=out_dtype if out_dtype is not None else melspec.dtype)
    patch_embed = out2d.reshape(b, w * h, E)

    if length is not None:
        patch_length = (height // patch_height) * (
            (length - length % patch_width) // patch_width)
    else:
        patch_length = None

    return patch, patch_embed, patch_length


# ---------------------------------- Main -------------------------------------

if __name__ == "__main__":
    # Small, module-consistent shapes.
    patch_height = 8
    patch_width = 4
    embed_dim = 32
    input_dim = 1
    b, c, H, W = 2, input_dim, 18, 10   # crops to 16 x 8 -> h=2, w=2, M=8

    key = jax.random.PRNGKey(0)
    k_x, k_w, k_b, k_x2, k_x3 = jax.random.split(key, 5)

    melspec = jax.random.normal(k_x, (b, c, H, W), dtype=jnp.float32)

    # Deterministic nn.Linear-style init: U(-1/sqrt(K), 1/sqrt(K)).
    K = patch_height * patch_width * input_dim
    bound = 1.0 / (K ** 0.5)
    weight = jax.random.uniform(k_w, (embed_dim, K), jnp.float32, -bound, bound)
    bias = jax.random.uniform(k_b, (embed_dim,), jnp.float32, -bound, bound)

    params = pack_patch_embed_params(weight, bias)        # f32 compute path

    # --- small shape: single (partial) block ---
    patch, patch_embed, patch_length = patch_embed_v2_forward(
        melspec, params, patch_height=patch_height, patch_width=patch_width)
    jax.block_until_ready(patch_embed)
    ref = patch @ weight.T + bias
    assert patch.shape == (b, (W // patch_width) * (H // patch_height), K)
    assert patch_embed.shape == patch.shape[:2] + (embed_dim,)
    assert patch_length is None
    assert jnp.allclose(patch_embed, ref, atol=1e-4, rtol=1e-4), \
        float(jnp.max(jnp.abs(patch_embed - ref)))

    # --- `length` branch (scalar-only path of the module) ---
    _, _, plen = patch_embed_v2_forward(
        melspec, params, patch_height=patch_height, patch_width=patch_width,
        length=10)
    assert plen == ((H - H % patch_height) // patch_height) * \
                   ((10 - 10 % patch_width) // patch_width)

    # --- larger shape: multi-step grid (even step count) + ragged last block ---
    b2, H2, W2 = 2, 66, 523             # crops to 64 x 520 -> h=8, w=130, M=2080
    mel2 = jax.random.normal(k_x2, (b2, c, H2, W2), dtype=jnp.float32)
    patch2, emb2, _ = patch_embed_v2_forward(
        mel2, params, patch_height=patch_height, patch_width=patch_width,
        tile_rows=128)                  # small tile -> several grid steps
    jax.block_until_ready(emb2)
    ref2 = patch2 @ weight.T + bias
    assert jnp.allclose(emb2, ref2, atol=1e-4, rtol=1e-4), \
        float(jnp.max(jnp.abs(emb2 - ref2)))

    # --- ragged M (exercises the tiny P-tail pad path, P=4 here) ---
    x_odd = jax.random.normal(k_x3, (10, K), dtype=jnp.float32)
    out_odd = _linear_pallas_packed(x_odd, params)
    jax.block_until_ready(out_odd)
    ref_odd = x_odd @ weight.T + bias
    assert jnp.allclose(out_odd, ref_odd, atol=1e-4, rtol=1e-4), \
        float(jnp.max(jnp.abs(out_odd - ref_odd)))

    # --- bf16 compute + bf16 output (opt-in reduced precision) ---
    params_bf16 = pack_patch_embed_params(weight, bias,
                                          compute_dtype=jnp.bfloat16)
    _, emb_bf16, _ = patch_embed_v2_forward(
        mel2, params_bf16, patch_height=patch_height, patch_width=patch_width,
        out_dtype=jnp.bfloat16, tile_rows=128)
    jax.block_until_ready(emb_bf16)
    assert emb_bf16.dtype == jnp.bfloat16
    assert jnp.allclose(emb_bf16.astype(jnp.float32), ref2,
                        atol=5e-2, rtol=5e-2), \
        float(jnp.max(jnp.abs(emb_bf16.astype(jnp.float32) - ref2)))

    print("KERNEL_OK")
</pallas_src>

<mosaic_0001>
module attributes {stable_mosaic.version = 11 : i64} {
  func.func @_linear_kernel(%arg0: i32, %arg1: memref<8x128xf32, #tpu.memory_space<vmem>>, %arg2: memref<128x128xf32, #tpu.memory_space<vmem>>, %arg3: memref<1x128xf32, #tpu.memory_space<vmem>>, %arg4: memref<8x128xf32, #tpu.memory_space<vmem>>) attributes {dimension_semantics = [#tpu.dimension_semantics<parallel>], iteration_bounds = array<i64: 1>, scalar_prefetch = 0 : i64, scratch_operands = 0 : i64, tpu.core_type = #tpu.core_type<tc>, window_params = [{transform_indices = @transform_0, window_bounds = array<i64: 8, 128>}, {pipeline_mode = #tpu.pipeline_mode<synchronous>, transform_indices = @transform_1, window_bounds = array<i64: 128, 128>}, {pipeline_mode = #tpu.pipeline_mode<synchronous>, transform_indices = @transform_2, window_bounds = array<i64: 1, 128>}, {transform_indices = @transform_3, window_bounds = array<i64: 8, 128>}]} {
    %c0 = arith.constant 0 : index
    %c0_0 = arith.constant 0 : index
    %0 = vector.load %arg1[%c0, %c0_0] : memref<8x128xf32, #tpu.memory_space<vmem>>, vector<8x128xf32>
    %c0_1 = arith.constant 0 : index
    %c0_2 = arith.constant 0 : index
    %1 = vector.load %arg2[%c0_1, %c0_2] : memref<128x128xf32, #tpu.memory_space<vmem>>, vector<128x128xf32>
    %cst = arith.constant dense<0.000000e+00> : vector<8x128xf32>
    %2 = tpu.matmul %0, %1, %cst {dimension_numbers = #tpu.dot_dimension_numbers<[1], [0], [0], [1], [0, 0, 1, 1], [], []>} : vector<8x128xf32>, vector<128x128xf32>, vector<8x128xf32> -> vector<8x128xf32>
    %c0_3 = arith.constant 0 : index
    %c0_4 = arith.constant 0 : index
    %3 = vector.load %arg3[%c0_3, %c0_4] : memref<1x128xf32, #tpu.memory_space<vmem>>, vector<1x128xf32>
    %4 = vector.broadcast %3 : vector<1x128xf32> to vector<8x128xf32>
    %5 = arith.addf %2, %4 : vector<8x128xf32>
    %c0_5 = arith.constant 0 : index
    %c0_6 = arith.constant 0 : index
    %6 = vector.load %arg4[%c0_5, %c0_6] : memref<8x128xf32, #tpu.memory_space<vmem>>, vector<8x128xf32>
    tpu.vector_store %arg4[%c0_5, %c0_6], %5 {strides = array<i32>} : memref<8x128xf32, #tpu.memory_space<vmem>>, vector<8x128xf32>,
    return
  }
  func.func @transform_0(%arg0: i32) -> (i32, i32) {
    %c0_i32 = arith.constant 0 : i32
    %c0_i32_0 = arith.constant 0 : i32
    return %arg0, %c0_i32 : i32, i32
  }
  func.func @transform_1(%arg0: i32) -> (i32, i32) {
    %c0_i32 = arith.constant 0 : i32
    %c0_i32_0 = arith.constant 0 : i32
    %c0_i32_1 = arith.constant 0 : i32
    return %c0_i32, %c0_i32_0 : i32, i32
  }
  func.func @transform_2(%arg0: i32) -> (i32, i32) {
    %c0_i32 = arith.constant 0 : i32
    %c0_i32_0 = arith.constant 0 : i32
    %c0_i32_1 = arith.constant 0 : i32
    return %c0_i32, %c0_i32_0 : i32, i32
  }
  func.func @transform_3(%arg0: i32) -> (i32, i32) {
    %c0_i32 = arith.constant 0 : i32
    %c0_i32_0 = arith.constant 0 : i32
    return %arg0, %c0_i32 : i32, i32
  }
}

module attributes {stable_mosaic.version = 11 : i64} {
  func.func @_linear_kernel(%arg0: i32, %arg1: memref<8x128xf32, #tpu.memory_space<vmem>>, %arg2: memref<128x128xf32, #tpu.memory_space<vmem>>, %arg3: memref<1x128xf32, #tpu.memory_space<vmem>>, %arg4: memref<8x128xf32, #tpu.memory_space<vmem>>) attributes {dimension_semantics = [#tpu.dimension_semantics<parallel>], iteration_bounds = array<i64: 1>, scalar_prefetch = 0 : i64, scratch_operands = 0 : i64, tpu.core_type = #tpu.core_type<tc>, window_params = [{transform_indices = @transform_0, window_bounds = array<i64: 8, 128>}, {pipeline_mode = #tpu.pipeline_mode<synchronous>, transform_indices = @transform_1, window_bounds = array<i64: 128, 128>}, {pipeline_mode = #tpu.pipeline_mode<synchronous>, transform_indices = @transform_2, window_bounds = array<i64: 1, 128>}, {transform_indices = @transform_3, window_bounds = array<i64: 8, 128>}]} {
    %c0 = arith.constant 0 : index
    %c0_0 = arith.constant 0 : index
    %0 = vector.load %arg1[%c0, %c0_0] : memref<8x128xf32, #tpu.memory_space<vmem>>, vector<8x128xf32>
    %c0_1 = arith.constant 0 : index
    %c0_2 = arith.constant 0 : index
    %1 = vector.load %arg2[%c0_1, %c0_2] : memref<128x128xf32, #tpu.memory_space<vmem>>, vector<128x128xf32>
    %cst = arith.constant dense<0.000000e+00> : vector<8x128xf32>
    %2 = tpu.matmul %0, %1, %cst {dimension_numbers = #tpu.dot_dimension_numbers<[1], [0], [0], [1], [0, 0, 1, 1], [], []>} : vector<8x128xf32>, vector<128x128xf32>, vector<8x128xf32> -> vector<8x128xf32>
    %c0_3 = arith.constant 0 : index
    %c0_4 = arith.constant 0 : index
    %3 = vector.load %arg3[%c0_3, %c0_4] : memref<1x128xf32, #tpu.memory_space<vmem>>, vector<1x128xf32>
    %4 = vector.broadcast %3 : vector<1x128xf32> to vector<8x128xf32>
    %5 = arith.addf %2, %4 : vector<8x128xf32>
    %c0_5 = arith.constant 0 : index
    %c0_6 = arith.constant 0 : index
    %6 = vector.load %arg4[%c0_5, %c0_6] : memref<8x128xf32, #tpu.memory_space<vmem>>, vector<8x128xf32>
    tpu.vector_store %arg4[%c0_5, %c0_6], %5 {strides = array<i32>} : memref<8x128xf32, #tpu.memory_space<vmem>>, vector<8x128xf32>,
    return
  }
  func.func @transform_0(%arg0: i32) -> (i32, i32) {
    %c0_i32 = arith.constant 0 : i32
    %c0_i32_0 = arith.constant 0 : i32
    return %arg0, %c0_i32 : i32, i32
  }
  func.func @transform_1(%arg0: i32) -> (i32, i32) {
    %c0_i32 = arith.constant 0 : i32
    %c0_i32_0 = arith.constant 0 : i32
    %c0_i32_1 = arith.constant 0 : i32
    return %c0_i32, %c0_i32_0 : i32, i32
  }
  func.func @transform_2(%arg0: i32) -> (i32, i32) {
    %c0_i32 = arith.constant 0 : i32
    %c0_i32_0 = arith.constant 0 : i32
    %c0_i32_1 = arith.constant 0 : i32
    return %c0_i32, %c0_i32_0 : i32, i32
  }
  func.func @transform_3(%arg0: i32) -> (i32, i32) {
    %c0_i32 = arith.constant 0 : i32
    %c0_i32_0 = arith.constant 0 : i32
    return %arg0, %c0_i32 : i32, i32
  }
}

</mosaic_0001>

<llo_original>
// kernel: tpu_custom_call.1
$region0: #{tpu_custom_call.1}
  #allocation0 [shape = 'u32[]', space=smem, size = 0x4, offset = 0x4, fixed_abs, tag = 'smem constant byte address 0x4 - core index']
  #allocation1 [shape = 'u32[144,128]{1,0:T(1,128)}', space=vmem, size = 0x12000, scoped, tag = 'internal scratch']
  %s0 = inlined_call_operand.hbm [shape: f32[2,128], index: 0, kind: input, shape index: {}]
  %s1 = inlined_call_operand.hbm [shape: f32[128,128], index: 1, kind: input, shape index: {}]
  %s2 = inlined_call_operand.vmem [shape: f32[1,128], index: 2, kind: input, shape index: {}]
  %s3 = inlined_call_operand.hbm [shape: f32[2,128], index: 3, kind: output, shape index: {}]
  %s4 = sld [smem:[#allocation0]]
  $region30: #{tpu_custom_call.1} parent=0
    _
  %s6 = ssub.s32 1, %s4
  %s7 = scalar_select 0, %s6, %s4
  $region1: #{tpu_custom_call.1} parent=0
    #allocation2 [shape = 'u8[4096]{0}', space=vmem, size = 0x1000, scoped, tag = 'input window, operand 0, single buffered']
    #allocation3 [shape = 's32[1]{0}', space=sflag, size = 0x4, scoped, tag = 'scoped memory for tpu_custom_call.1']
    #allocation4 [shape = 's32[1]{0}', space=sflag, size = 0x4, scoped, tag = 'scoped memory for tpu_custom_call.1']
    #allocation5 [shape = 'u8[65536]{0}', space=vmem, size = 0x10000, scoped, tag = 'input window, operand 1, single buffered']
    #allocation6 [shape = 's32[1]{0}', space=sflag, size = 0x4, scoped, tag = 'scoped memory for tpu_custom_call.1']
    #allocation7 [shape = 'u8[4096]{0}', space=vmem, size = 0x1000, scoped, tag = 'output window, operand 0, single buffered']
    %8 = vsyncpa [#allocation3], 0
    %9 = vsyncpa [#allocation6], 0
    %10 = vsyncpa [#allocation4], 0
    // Predicated region
    $region2: #{tpu_custom_call.1} parent=1 // pred_check
      _
    $region3: #{tpu_custom_call.1} parent=1 // pred_check_branch
      %12 = sbr.rel (0) target = $region5
    $region4: #{tpu_custom_call.1} parent=1 // pred_region
      %s14 = ssub.s32 128, 32
      %15 = vsyncadd [#allocation3], %s14
      %s16 = sshll.u32 [#allocation2], 4
      %s17 = int_to_ptr.vmem [resolvable:$true] %s16
      %22 = dma.hbm_to_vmem [thread:$0]  %s0, 32, %s17, [#allocation3], 32, 32, 2
    $region5: #{tpu_custom_call.1} parent=1 // pred_fallthru
      _
    // Predicated region
    $region6: #{tpu_custom_call.1} parent=1 // pred_check
      _
    $region7: #{tpu_custom_call.1} parent=1 // pred_check_branch
      %24 = sbr.rel (0) target = $region9
    $region8: #{tpu_custom_call.1} parent=1 // pred_region
      %s26 = ssub.s32 2048, 2048
      %27 = vsyncadd [#allocation6], %s26
      %s28 = sshll.u32 [#allocation5], 4
      %s29 = int_to_ptr.vmem [resolvable:$true] %s28
      %34 = dma.hbm_to_vmem [thread:$0]  %s1, 2048, %s29, [#allocation6], 128, 128, 8
    $region9: #{tpu_custom_call.1} parent=1 // pred_fallthru
      _
    // Predicated region
    $region10: #{tpu_custom_call.1} parent=1 // pred_check
      _
    $region11: #{tpu_custom_call.1} parent=1 // pred_check_branch
      %36 = sbr.rel (0) target = $region13
    $region12: #{tpu_custom_call.1} parent=1 // pred_region
      _
    $region13: #{tpu_custom_call.1} parent=1 // pred_fallthru
      _
    // Predicated region
    $region14: #{tpu_custom_call.1} parent=1 // pred_check
      _
    $region15: #{tpu_custom_call.1} parent=1 // pred_check_branch
      %38 = sbr.rel (0) target = $region17
    $region16: #{tpu_custom_call.1} parent=1 // pred_region
      %39 = dma.done [#allocation3], 128
    $region17: #{tpu_custom_call.1} parent=1 // pred_fallthru
      _
    // Predicated region
    $region18: #{tpu_custom_call.1} parent=1 // pred_check
      _
    $region19: #{tpu_custom_call.1} parent=1 // pred_check_branch
      %41 = sbr.rel (0) target = $region21
    $region20: #{tpu_custom_call.1} parent=1 // pred_region
      %42 = dma.done [#allocation6], 2048
    $region21: #{tpu_custom_call.1} parent=1 // pred_fallthru
      _
    %v43 = vld [vmem:[#allocation2] sm:$0xff]
    %v44 = vld [vmem:[#allocation5] sm:$0xff]
    %v45 = vld [vmem:[#allocation5 + $0x8] sm:$0xff]
    %v46 = vld [vmem:[#allocation5 + $0x10] sm:$0xff]
    %v47 = vld [vmem:[#allocation5 + $0x18] sm:$0xff]
    %v48 = vld [vmem:[#allocation5 + $0x20] sm:$0xff]
    %v49 = vld [vmem:[#allocation5 + $0x28] sm:$0xff]
    %v50 = vld [vmem:[#allocation5 + $0x30] sm:$0xff]
    %v51 = vld [vmem:[#allocation5 + $0x38] sm:$0xff]
    %v52 = vld [vmem:[#allocation5 + $0x40] sm:$0xff]
    %v53 = vld [vmem:[#allocation5 + $0x48] sm:$0xff]
    %v54 = vld [vmem:[#allocation5 + $0x50] sm:$0xff]
    %v55 = vld [vmem:[#allocation5 + $0x58] sm:$0xff]
    %v56 = vld [vmem:[#allocation5 + $0x60] sm:$0xff]
    %v57 = vld [vmem:[#allocation5 + $0x68] sm:$0xff]
    %v58 = vld [vmem:[#allocation5 + $0x70] sm:$0xff]
    %v59 = vld [vmem:[#allocation5 + $0x78] sm:$0xff]
    %v60 = vld [vmem:[%s2] sm:$0x1]
    %v62 = vlaneseq
    %v63 = vshrl.u32 %v62, 7
    %v64 = vsub.s32 0, %v63
    %v65 = vrot.slane %v60, %v64
    %67 = vmatprep.subr.mxu0 0.0
    %68 = vmatpush1.msra.mxu0 %v44
    %69 = vmatprep.subr.mxu0 0.0
    %70 = vmatpush1.msra.mxu0 %v45
    %71 = vmatprep.subr.mxu0 0.0
    %72 = vmatpush1.msra.mxu0 %v46
    %73 = vmatprep.subr.mxu0 0.0
    %74 = vmatpush1.msra.mxu0 %v47
    %75 = vmatprep.subr.mxu0 0.0
    %76 = vmatpush1.msra.mxu0 %v48
    %77 = vmatprep.subr.mxu0 0.0
    %78 = vmatpush1.msra.mxu0 %v49
    %79 = vmatprep.subr.mxu0 0.0
    %80 = vmatpush1.msra.mxu0 %v50
    %81 = vmatprep.subr.mxu0 0.0
    %82 = vmatpush1.msra.mxu0 %v51
    %83 = vmatprep.subr.mxu0 0.0
    %84 = vmatpush1.msra.mxu0 %v52
    %85 = vmatprep.subr.mxu0 0.0
    %86 = vmatpush1.msra.mxu0 %v53
    %87 = vmatprep.subr.mxu0 0.0
    %88 = vmatpush1.msra.mxu0 %v54
    %89 = vmatprep.subr.mxu0 0.0
    %90 = vmatpush1.msra.mxu0 %v55
    %91 = vmatprep.subr.mxu0 0.0
    %92 = vmatpush1.msra.mxu0 %v56
    %93 = vmatprep.subr.mxu0 0.0
    %94 = vmatpush1.msra.mxu0 %v57
    %95 = vmatprep.subr.mxu0 0.0
    %96 = vmatpush1.msra.mxu0 %v58
    %97 = vmatprep.subr.mxu0 0.0
    %98 = vmatpush1.msra.mxu0 %v59
    %99 = vmatprep.subr.mxu0 0.0
    %100 = vmatpush1.msra.mxu0 0.0
    %101 = vmatprep.subr.mxu0 0.0
    %102 = vmatpush1.msra.mxu0 0.0
    %103 = vmatprep.subr.mxu0 0.0
    %104 = vmatpush1.msra.mxu0 0.0
    %105 = vmatprep.subr.mxu0 0.0
    %106 = vmatpush1.msra.mxu0 0.0
    %107 = vmatprep.subr.mxu0 0.0
    %108 = vmatpush1.msra.mxu0 0.0
    %109 = vmatprep.subr.mxu0 0.0
    %110 = vmatpush1.msra.mxu0 0.0
    %111 = vmatprep.subr.mxu0 0.0
    %112 = vmatpush1.msra.mxu0 0.0
    %113 = vmatprep.subr.mxu0 0.0
    %114 = vmatpush1.msra.mxu0 0.0
    %115 = vmatprep.subr.mxu0 0.0
    %116 = vmatpush1.msra.mxu0 0.0
    %117 = vmatprep.subr.mxu0 0.0
    %118 = vmatpush1.msra.mxu0 0.0
    %119 = vmatprep.subr.mxu0 0.0
    %120 = vmatpush1.msra.mxu0 0.0
    %121 = vmatprep.subr.mxu0 0.0
    %122 = vmatpush1.msra.mxu0 0.0
    %123 = vmatprep.subr.mxu0 0.0
    %124 = vmatpush1.msra.mxu0 0.0
    %125 = vmatprep.subr.mxu0 0.0
    %126 = vmatpush1.msra.mxu0 0.0
    %127 = vmatprep.subr.mxu0 0.0
    %128 = vmatpush1.msra.mxu0 0.0
    %129 = vmatprep.subr.mxu0 0.0
    %130 = vmatpush1.msra.mxu0 0.0
    %131 = vmatprep.mubr.f32.mxu0 0.0
    %132 = vmatmul.mubr.f32.gmra.mrb[0].mxu0 %v43
    %v133 = vpop.f32.mrb[0].mxu0
    %v134 = vadd.f32 %v65, %v133
    %v135 = vpop.f32.mrb[0].mxu0
    %136 = vdwg.mxu0
    %137 = vst [vmem:[#allocation7] sm:$0xff] %v134
    // Predicated region
    $region22: #{tpu_custom_call.1} parent=1 // pred_check
      _
    $region23: #{tpu_custom_call.1} parent=1 // pred_check_branch
      %139 = sbr.rel (0) target = $region25
    $region24: #{tpu_custom_call.1} parent=1 // pred_region
      %s141 = ssub.s32 128, 32
      %142 = vsyncadd [#allocation4], %s141
      %s143 = sshll.u32 [#allocation7], 4
      %s144 = int_to_ptr.vmem [resolvable:$true] %s143
      %149 = dma.vmem_to_hbm [thread:$0]  %s144, 32, %s3, [#allocation4], 32, 32, 2
    $region25: #{tpu_custom_call.1} parent=1 // pred_fallthru
      _
    // Predicated region
    $region26: #{tpu_custom_call.1} parent=1 // pred_check
      _
    $region27: #{tpu_custom_call.1} parent=1 // pred_check_branch
      %151 = sbr.rel (0) target = $region29
    $region28: #{tpu_custom_call.1} parent=1 // pred_region
      %152 = dma.done [#allocation4], 128
    $region29: #{tpu_custom_call.1} parent=1 // pred_fallthru
      _
    %153 = vsyncpa [#allocation3], 1
    %154 = vsyncpa [#allocation6], 1
    %155 = vsyncpa [#allocation4], 1

// kernel: tpu_custom_call.1
$region0: #{tpu_custom_call.1}
  #allocation0 [shape = 'u32[]', space=smem, size = 0x4, offset = 0x4, fixed_abs, tag = 'smem constant byte address 0x4 - core index']
  #allocation1 [shape = 'u32[144,128]{1,0:T(1,128)}', space=vmem, size = 0x12000, scoped, tag = 'internal scratch']
  %s0 = inlined_call_operand.hbm [shape: f32[2,128], index: 0, kind: input, shape index: {}]
  %s1 = inlined_call_operand.hbm [shape: f32[128,128], index: 1, kind: input, shape index: {}]
  %s2 = inlined_call_operand.vmem [shape: f32[1,128], index: 2, kind: input, shape index: {}]
  %s3 = inlined_call_operand.hbm [shape: f32[2,128], index: 3, kind: output, shape index: {}]
  %s4 = sld [smem:[#allocation0]]
  $region30: #{tpu_custom_call.1} parent=0
    _
  %s6 = ssub.s32 1, %s4
  %s7 = scalar_select 0, %s6, %s4
  $region1: #{tpu_custom_call.1} parent=0
    #allocation2 [shape = 'u8[4096]{0}', space=vmem, size = 0x1000, scoped, tag = 'input window, operand 0, single buffered']
    #allocation3 [shape = 's32[1]{0}', space=sflag, size = 0x4, scoped, tag = 'scoped memory for tpu_custom_call.1']
    #allocation4 [shape = 's32[1]{0}', space=sflag, size = 0x4, scoped, tag = 'scoped memory for tpu_custom_call.1']
    #allocation5 [shape = 'u8[65536]{0}', space=vmem, size = 0x10000, scoped, tag = 'input window, operand 1, single buffered']
    #allocation6 [shape = 's32[1]{0}', space=sflag, size = 0x4, scoped, tag = 'scoped memory for tpu_custom_call.1']
    #allocation7 [shape = 'u8[4096]{0}', space=vmem, size = 0x1000, scoped, tag = 'output window, operand 0, single buffered']
    %8 = vsyncpa [#allocation3], 0
    %9 = vsyncpa [#allocation6], 0
    %10 = vsyncpa [#allocation4], 0
    // Predicated region
    $region2: #{tpu_custom_call.1} parent=1 // pred_check
      _
    $region3: #{tpu_custom_call.1} parent=1 // pred_check_branch
      %12 = sbr.rel (0) target = $region5
    $region4: #{tpu_custom_call.1} parent=1 // pred_region
      %s14 = ssub.s32 128, 32
      %15 = vsyncadd [#allocation3], %s14
      %s16 = sshll.u32 [#allocation2], 4
      %s17 = int_to_ptr.vmem [resolvable:$true] %s16
      %22 = dma.hbm_to_vmem [thread:$0]  %s0, 32, %s17, [#allocation3], 32, 32, 2
    $region5: #{tpu_custom_call.1} parent=1 // pred_fallthru
      _
    // Predicated region
    $region6: #{tpu_custom_call.1} parent=1 // pred_check
      _
    $region7: #{tpu_custom_call.1} parent=1 // pred_check_branch
      %24 = sbr.rel (0) target = $region9
    $region8: #{tpu_custom_call.1} parent=1 // pred_region
      %s26 = ssub.s32 2048, 2048
      %27 = vsyncadd [#allocation6], %s26
      %s28 = sshll.u32 [#allocation5], 4
      %s29 = int_to_ptr.vmem [resolvable:$true] %s28
      %34 = dma.hbm_to_vmem [thread:$0]  %s1, 2048, %s29, [#allocation6], 128, 128, 8
    $region9: #{tpu_custom_call.1} parent=1 // pred_fallthru
      _
    // Predicated region
    $region10: #{tpu_custom_call.1} parent=1 // pred_check
      _
    $region11: #{tpu_custom_call.1} parent=1 // pred_check_branch
      %36 = sbr.rel (0) target = $region13
    $region12: #{tpu_custom_call.1} parent=1 // pred_region
      _
    $region13: #{tpu_custom_call.1} parent=1 // pred_fallthru
      _
    // Predicated region
    $region14: #{tpu_custom_call.1} parent=1 // pred_check
      _
    $region15: #{tpu_custom_call.1} parent=1 // pred_check_branch
      %38 = sbr.rel (0) target = $region17
    $region16: #{tpu_custom_call.1} parent=1 // pred_region
      %39 = dma.done [#allocation3], 128
    $region17: #{tpu_custom_call.1} parent=1 // pred_fallthru
      _
    // Predicated region
    $region18: #{tpu_custom_call.1} parent=1 // pred_check
      _
    $region19: #{tpu_custom_call.1} parent=1 // pred_check_branch
      %41 = sbr.rel (0) target = $region21
    $region20: #{tpu_custom_call.1} parent=1 // pred_region
      %42 = dma.done [#allocation6], 2048
    $region21: #{tpu_custom_call.1} parent=1 // pred_fallthru
      _
    %v43 = vld [vmem:[#allocation2] sm:$0xff]
    %v44 = vld [vmem:[#allocation5] sm:$0xff]
    %v45 = vld [vmem:[#allocation5 + $0x8] sm:$0xff]
    %v46 = vld [vmem:[#allocation5 + $0x10] sm:$0xff]
    %v47 = vld [vmem:[#allocation5 + $0x18] sm:$0xff]
    %v48 = vld [vmem:[#allocation5 + $0x20] sm:$0xff]
    %v49 = vld [vmem:[#allocation5 + $0x28] sm:$0xff]
    %v50 = vld [vmem:[#allocation5 + $0x30] sm:$0xff]
    %v51 = vld [vmem:[#allocation5 + $0x38] sm:$0xff]
    %v52 = vld [vmem:[#allocation5 + $0x40] sm:$0xff]
    %v53 = vld [vmem:[#allocation5 + $0x48] sm:$0xff]
    %v54 = vld [vmem:[#allocation5 + $0x50] sm:$0xff]
    %v55 = vld [vmem:[#allocation5 + $0x58] sm:$0xff]
    %v56 = vld [vmem:[#allocation5 + $0x60] sm:$0xff]
    %v57 = vld [vmem:[#allocation5 + $0x68] sm:$0xff]
    %v58 = vld [vmem:[#allocation5 + $0x70] sm:$0xff]
    %v59 = vld [vmem:[#allocation5 + $0x78] sm:$0xff]
    %v60 = vld [vmem:[%s2] sm:$0x1]
    %v62 = vlaneseq
    %v63 = vshrl.u32 %v62, 7
    %v64 = vsub.s32 0, %v63
    %v65 = vrot.slane %v60, %v64
    %67 = vmatprep.subr.mxu0 0.0
    %68 = vmatpush1.msra.mxu0 %v44
    %69 = vmatprep.subr.mxu0 0.0
    %70 = vmatpush1.msra.mxu0 %v45
    %71 = vmatprep.subr.mxu0 0.0
    %72 = vmatpush1.msra.mxu0 %v46
    %73 = vmatprep.subr.mxu0 0.0
    %74 = vmatpush1.msra.mxu0 %v47
    %75 = vmatprep.subr.mxu0 0.0
    %76 = vmatpush1.msra.mxu0 %v48
    %77 = vmatprep.subr.mxu0 0.0
    %78 = vmatpush1.msra.mxu0 %v49
    %79 = vmatprep.subr.mxu0 0.0
    %80 = vmatpush1.msra.mxu0 %v50
    %81 = vmatprep.subr.mxu0 0.0
    %82 = vmatpush1.msra.mxu0 %v51
    %83 = vmatprep.subr.mxu0 0.0
    %84 = vmatpush1.msra.mxu0 %v52
    %85 = vmatprep.subr.mxu0 0.0
    %86 = vmatpush1.msra.mxu0 %v53
    %87 = vmatprep.subr.mxu0 0.0
    %88 = vmatpush1.msra.mxu0 %v54
    %89 = vmatprep.subr.mxu0 0.0
    %90 = vmatpush1.msra.mxu0 %v55
    %91 = vmatprep.subr.mxu0 0.0
    %92 = vmatpush1.msra.mxu0 %v56
    %93 = vmatprep.subr.mxu0 0.0
    %94 = vmatpush1.msra.mxu0 %v57
    %95 = vmatprep.subr.mxu0 0.0
    %96 = vmatpush1.msra.mxu0 %v58
    %97 = vmatprep.subr.mxu0 0.0
    %98 = vmatpush1.msra.mxu0 %v59
    %99 = vmatprep.subr.mxu0 0.0
    %100 = vmatpush1.msra.mxu0 0.0
    %101 = vmatprep.subr.mxu0 0.0
    %102 = vmatpush1.msra.mxu0 0.0
    %103 = vmatprep.subr.mxu0 0.0
    %104 = vmatpush1.msra.mxu0 0.0
    %105 = vmatprep.subr.mxu0 0.0
    %106 = vmatpush1.msra.mxu0 0.0
    %107 = vmatprep.subr.mxu0 0.0
    %108 = vmatpush1.msra.mxu0 0.0
    %109 = vmatprep.subr.mxu0 0.0
    %110 = vmatpush1.msra.mxu0 0.0
    %111 = vmatprep.subr.mxu0 0.0
    %112 = vmatpush1.msra.mxu0 0.0
    %113 = vmatprep.subr.mxu0 0.0
    %114 = vmatpush1.msra.mxu0 0.0
    %115 = vmatprep.subr.mxu0 0.0
    %116 = vmatpush1.msra.mxu0 0.0
    %117 = vmatprep.subr.mxu0 0.0
    %118 = vmatpush1.msra.mxu0 0.0
    %119 = vmatprep.subr.mxu0 0.0
    %120 = vmatpush1.msra.mxu0 0.0
    %121 = vmatprep.subr.mxu0 0.0
    %122 = vmatpush1.msra.mxu0 0.0
    %123 = vmatprep.subr.mxu0 0.0
    %124 = vmatpush1.msra.mxu0 0.0
    %125 = vmatprep.subr.mxu0 0.0
    %126 = vmatpush1.msra.mxu0 0.0
    %127 = vmatprep.subr.mxu0 0.0
    %128 = vmatpush1.msra.mxu0 0.0
    %129 = vmatprep.subr.mxu0 0.0
    %130 = vmatpush1.msra.mxu0 0.0
    %131 = vmatprep.mubr.f32.mxu0 0.0
    %132 = vmatmul.mubr.f32.gmra.mrb[0].mxu0 %v43
    %v133 = vpop.f32.mrb[0].mxu0
    %v134 = vadd.f32 %v65, %v133
    %v135 = vpop.f32.mrb[0].mxu0
    %136 = vdwg.mxu0
    %137 = vst [vmem:[#allocation7] sm:$0xff] %v134
    // Predicated region
    $region22: #{tpu_custom_call.1} parent=1 // pred_check
      _
    $region23: #{tpu_custom_call.1} parent=1 // pred_check_branch
      %139 = sbr.rel (0) target = $region25
    $region24: #{tpu_custom_call.1} parent=1 // pred_region
      %s141 = ssub.s32 128, 32
      %142 = vsyncadd [#allocation4], %s141
      %s143 = sshll.u32 [#allocation7], 4
      %s144 = int_to_ptr.vmem [resolvable:$true] %s143
      %149 = dma.vmem_to_hbm [thread:$0]  %s144, 32, %s3, [#allocation4], 32, 32, 2
    $region25: #{tpu_custom_call.1} parent=1 // pred_fallthru
      _
    // Predicated region
    $region26: #{tpu_custom_call.1} parent=1 // pred_check
      _
    $region27: #{tpu_custom_call.1} parent=1 // pred_check_branch
      %151 = sbr.rel (0) target = $region29
    $region28: #{tpu_custom_call.1} parent=1 // pred_region
      %152 = dma.done [#allocation4], 128
    $region29: #{tpu_custom_call.1} parent=1 // pred_fallthru
      _
    %153 = vsyncpa [#allocation3], 1
    %154 = vsyncpa [#allocation6], 1
    %155 = vsyncpa [#allocation4], 1

</llo_original>
